<compile_context>
chip_gen: v5e
topology: v5e:2x2
jax: 0.10.0
libtpu: 0.0.40
codegen_flags: <defaults>
</compile_context>

<pallas_src>
import jax
import jax.numpy as jnp
from jax.experimental import pallas as pl
from jax.experimental.pallas import tpu as pltpu

# Module constants (same as the PyTorch script)
INPUT_SIZE = 100
LAYER1_NODE = 512
OUTPUT_SIZE = 10
BATCH = 8

N_PAD = 128           # lane-dense class dim for w2 / output block
MAX_TILE_ROWS = 2048  # grid path: keeps per-tile intermediates well under scoped VMEM
VMEM_LIMIT_BYTES = 48 * 1024 * 1024  # safe on every generation (v7x physical = 64 MiB)


def _round_up(x, m):
    return ((x + m - 1) // m) * m


def _default_gridless_threshold():
    """Max batch rows for the grid-less (whole batch resident in VMEM) path.

    Single-TensorCore chips (v5e/v6e) gain nothing from a 1-D parallel grid,
    so they go grid-less whenever the working set (dominated by the (b, 512)
    f32 hidden activation, not just x/out/weights) fits scoped VMEM.  v7x has
    2 TensorCores per chip, so larger batches prefer the parallel-grid path.
    """
    try:
        kind = jax.devices()[0].device_kind.lower()
    except Exception:
        kind = ""
    if "v7" in kind or "7x" in kind:
        return 1024
    return 2048


def net_kernel(x_ref, w1_ref, w2_ref, o_ref):
    """Whole forward pass for one batch tile.

    x_ref : (tile_m, INPUT_SIZE)       f32 raw frequencies
    w1_ref: (INPUT_SIZE, LAYER1_NODE)  f32
    w2_ref: (LAYER1_NODE, N_PAD)       f32, columns >= OUTPUT_SIZE are zero
    o_ref : (tile_m, N_PAD)            f32 softmax probs (pad lanes are 0)
    """
    x = x_ref[...]

    # ---- layer1: F2C (floor-div, inference branch) + matmul + bias=3 ----
    h = jnp.floor(x / 10.0) - 1.0
    h = jnp.dot(h, w1_ref[...], preferred_element_type=jnp.float32) + 3.0

    # ---- ReLU ----
    h = jnp.maximum(h, 0.0)

    # ---- Mapping + dropout + second F2C, algebraically simplified ----
    # g = floor(relu(h)/400) is an exact small non-negative integer, so
    #   (g + 5) * 10  ->  dropout(identity)  ->  floor(. / 10) - 1  ==  g + 4
    # TODO(synk): nn.Dropout(0.2) is stochastic in torch train mode; identity
    # (inference semantics, is_train=None) is used here.
    g = jnp.floor(h / (4.0 * INPUT_SIZE))
    h2 = g + 4.0

    # ---- layer2: matmul + bias=3 (padded w2 columns are zero) ----
    logits = jnp.dot(h2, w2_ref[...], preferred_element_type=jnp.float32) + 3.0

    # ---- Softmax over the class axis: mask pad lanes BEFORE max/exp/sum ----
    lane = jax.lax.broadcasted_iota(jnp.int32, logits.shape, dimension=1)
    logits = jnp.where(lane < OUTPUT_SIZE, logits, -1e30)
    m = jnp.max(logits, axis=-1, keepdims=True)
    e = jnp.exp(logits - m)
    denom = jnp.sum(e, axis=-1, keepdims=True)
    o_ref[...] = e * pl.reciprocal(denom, approx=True)


def pad_classes(w2):
    """Zero-pad w2's class dim OUTPUT_SIZE -> N_PAD once at init (lane-dense output)."""
    _, n = w2.shape
    return jnp.pad(w2, ((0, 0), (0, N_PAD - n)))


def _cost_estimate(b, k, hid):
    return pl.CostEstimate(
        flops=2 * b * (k * hid + hid * OUTPUT_SIZE),
        transcendentals=b * N_PAD,
        bytes_accessed=4 * (b * k + b * N_PAD + k * hid + hid * N_PAD),
    )


def net_forward(x, w1, w2_padded, *, gridless_max_rows=None, num_parallel_tiles=2):
    """Forward pass. `w2_padded` must have N_PAD columns (see pad_classes)."""
    b, k = x.shape
    kp, hid = w1.shape
    hid2, n_pad = w2_padded.shape
    assert k == kp and hid == hid2 and n_pad == N_PAD

    if gridless_max_rows is None:
        gridless_max_rows = _default_gridless_threshold()

    if b <= gridless_max_rows:
        # Grid-less: whole batch + weights resident in VMEM, no pipeline
        # machinery / per-step overhead.  No padding of x at all (K stays 100).
        out = pl.pallas_call(
            net_kernel,
            out_shape=jax.ShapeDtypeStruct((b, N_PAD), jnp.float32),
            in_specs=[
                pl.BlockSpec(memory_space=pltpu.MemorySpace.VMEM),
                pl.BlockSpec(memory_space=pltpu.MemorySpace.VMEM),
                pl.BlockSpec(memory_space=pltpu.MemorySpace.VMEM),
            ],
            out_specs=pl.BlockSpec(memory_space=pltpu.MemorySpace.VMEM),
            compiler_params=pltpu.CompilerParams(
                vmem_limit_bytes=VMEM_LIMIT_BYTES),
            cost_estimate=_cost_estimate(b, k, hid),
        )(x, w1, w2_padded)
        return out[:, :OUTPUT_SIZE]

    # Grid path: as few row tiles as possible (>= num_parallel_tiles so v7x's
    # two TensorCores each take a tile), weights resident across tiles.
    n_tiles = max(num_parallel_tiles, pl.cdiv(b, MAX_TILE_ROWS))
    tile_m = _round_up(pl.cdiv(b, n_tiles), 8)
    bp = tile_m * n_tiles
    if bp != b:
        # TODO(synk): this row pad costs one extra pass over x; callers whose
        # batch is already a multiple of (8 * n_tiles) skip it entirely.
        x = jnp.pad(x, ((0, bp - b), (0, 0)))
    out = pl.pallas_call(
        net_kernel,
        out_shape=jax.ShapeDtypeStruct((bp, N_PAD), jnp.float32),
        grid=(n_tiles,),
        in_specs=[
            pl.BlockSpec((tile_m, k), lambda i: (i, 0)),   # K=100 == full last dim
            pl.BlockSpec((kp, hid), lambda i: (0, 0)),     # resident across tiles
            pl.BlockSpec((hid, N_PAD), lambda i: (0, 0)),  # resident across tiles
        ],
        out_specs=pl.BlockSpec((tile_m, N_PAD), lambda i: (i, 0)),
        compiler_params=pltpu.CompilerParams(
            dimension_semantics=("parallel",),
            vmem_limit_bytes=VMEM_LIMIT_BYTES),
        cost_estimate=_cost_estimate(bp, k, hid),
    )(x, w1, w2_padded)
    return out[:b, :OUTPUT_SIZE]


def reference_forward(x, w1, w2):
    """Pure-JAX replica of the original (un-simplified) torch forward, inference path."""
    hp = jax.lax.Precision.HIGHEST
    h = jnp.floor(x / 10.0) - 1.0
    h = jnp.dot(h, w1, precision=hp) + 3.0
    h = jnp.maximum(h, 0.0)
    h = jnp.floor(h / (4.0 * INPUT_SIZE))
    h = (h + 5.0) * 10.0
    h2 = jnp.floor(h / 10.0) - 1.0
    h2 = jnp.dot(h2, w2, precision=hp) + 3.0
    return jax.nn.softmax(h2, axis=1)


def row_mismatch_fraction(out, ref, tol=1e-2):
    # floor(./400) right after a matmul is boundary-sensitive: a 1-ulp
    # difference between the MXU and XLA matmul summation order can flip an
    # integer for a (rare) element sitting on a multiple of 400, changing that
    # whole row.  Compare row-wise and allow a tiny fraction of such rows.
    bad = jnp.any(jnp.abs(out - ref) > tol, axis=1)
    return float(jnp.mean(bad.astype(jnp.float32)))


def _check(out, ref, shape):
    assert out.shape == shape
    assert bool(jnp.all(jnp.isfinite(out)))
    assert bool(jnp.allclose(jnp.sum(out, axis=1), 1.0, atol=1e-2))
    assert row_mismatch_fraction(out, ref) <= 0.01


if __name__ == "__main__":
    key = jax.random.PRNGKey(0)
    kx, kw1, kw2, kxb = jax.random.split(key, 4)

    # Deterministic init: uniform(-3, 3), same as torch.nn.init.uniform_
    w1 = jax.random.uniform(kw1, (INPUT_SIZE, LAYER1_NODE),
                            dtype=jnp.float32, minval=-3.0, maxval=3.0)
    w2 = jax.random.uniform(kw2, (LAYER1_NODE, OUTPUT_SIZE),
                            dtype=jnp.float32, minval=-3.0, maxval=3.0)
    w2_padded = pad_classes(w2)   # pad classes 10 -> 128 once at init (lane-dense out)

    # ---- small batch: grid-less, everything VMEM-resident ----
    x = jax.random.uniform(kx, (BATCH, INPUT_SIZE),
                           dtype=jnp.float32, minval=0.0, maxval=100.0)
    out = jax.block_until_ready(net_forward(x, w1, w2_padded))
    _check(out, reference_forward(x, w1, w2), (BATCH, OUTPUT_SIZE))

    # ---- moderate batch: path chosen per chip (grid-less on single-TC
    #      v5e/v6e, 2-tile parallel grid on v7x) ----
    xb = jax.random.uniform(kxb, (2048, INPUT_SIZE),
                            dtype=jnp.float32, minval=0.0, maxval=100.0)
    refb = reference_forward(xb, w1, w2)
    outb = jax.block_until_ready(net_forward(xb, w1, w2_padded))
    _check(outb, refb, (2048, OUTPUT_SIZE))

    # ---- force the parallel-grid path so it is exercised on every chip
    #      (exactly one tile per TensorCore on v7x) ----
    outg = jax.block_until_ready(
        net_forward(xb, w1, w2_padded, gridless_max_rows=0))
    _check(outg, refb, (2048, OUTPUT_SIZE))

    print("KERNEL_OK")
</pallas_src>

<mosaic_0001>
module attributes {stable_mosaic.version = 11 : i64} {
  func.func @net_kernel(%arg0: memref<8x100xf32, #tpu.memory_space<vmem>>, %arg1: memref<100x512xf32, #tpu.memory_space<vmem>>, %arg2: memref<512x128xf32, #tpu.memory_space<vmem>>, %arg3: memref<8x128xf32, #tpu.memory_space<vmem>>) attributes {dimension_semantics = [], scalar_prefetch = 0 : i64, scratch_operands = 0 : i64, tpu.core_type = #tpu.core_type<tc>} {
    %c0 = arith.constant 0 : index
    %c0_0 = arith.constant 0 : index
    %0 = vector.load %arg0[%c0, %c0_0] : memref<8x100xf32, #tpu.memory_space<vmem>>, vector<8x100xf32>
    %cst = arith.constant 1.000000e+01 : f32
    %1 = vector.broadcast %cst : f32 to vector<8x100xf32>
    %2 = arith.divf %0, %1 : vector<8x100xf32>
    %3 = math.floor %2 : vector<8x100xf32>
    %cst_1 = arith.constant 1.000000e+00 : f32
    %4 = vector.broadcast %cst_1 : f32 to vector<8x100xf32>
    %5 = arith.subf %3, %4 : vector<8x100xf32>
    %c0_2 = arith.constant 0 : index
    %c0_3 = arith.constant 0 : index
    %6 = vector.load %arg1[%c0_2, %c0_3] : memref<100x512xf32, #tpu.memory_space<vmem>>, vector<100x512xf32>
    %cst_4 = arith.constant dense<0.000000e+00> : vector<8x512xf32>
    %7 = tpu.matmul %5, %6, %cst_4 {dimension_numbers = #tpu.dot_dimension_numbers<[1], [0], [0], [1], [0, 0, 1, 1], [], []>} : vector<8x100xf32>, vector<100x512xf32>, vector<8x512xf32> -> vector<8x512xf32>
    %cst_5 = arith.constant 3.000000e+00 : f32
    %8 = vector.broadcast %cst_5 : f32 to vector<8x512xf32>
    %9 = arith.addf %7, %8 : vector<8x512xf32>
    %cst_6 = arith.constant 0.000000e+00 : f32
    %10 = vector.broadcast %cst_6 : f32 to vector<8x512xf32>
    %11 = arith.maximumf %9, %10 : vector<8x512xf32>
    %cst_7 = arith.constant 4.000000e+02 : f32
    %12 = vector.broadcast %cst_7 : f32 to vector<8x512xf32>
    %13 = arith.divf %11, %12 : vector<8x512xf32>
    %14 = math.floor %13 : vector<8x512xf32>
    %cst_8 = arith.constant 4.000000e+00 : f32
    %15 = vector.broadcast %cst_8 : f32 to vector<8x512xf32>
    %16 = arith.addf %14, %15 : vector<8x512xf32>
    %c0_9 = arith.constant 0 : index
    %c0_10 = arith.constant 0 : index
    %17 = vector.load %arg2[%c0_9, %c0_10] : memref<512x128xf32, #tpu.memory_space<vmem>>, vector<512x128xf32>
    %cst_11 = arith.constant dense<0.000000e+00> : vector<8x128xf32>
    %18 = tpu.matmul %16, %17, %cst_11 {dimension_numbers = #tpu.dot_dimension_numbers<[1], [0], [0], [1], [0, 0, 1, 1], [], []>} : vector<8x512xf32>, vector<512x128xf32>, vector<8x128xf32> -> vector<8x128xf32>
    %cst_12 = arith.constant 3.000000e+00 : f32
    %19 = vector.broadcast %cst_12 : f32 to vector<8x128xf32>
    %20 = arith.addf %18, %19 : vector<8x128xf32>
    %21 = tpu.iota {dimensions = array<i32: 1>} : vector<8x128xi32>
    %c10_i32 = arith.constant 10 : i32
    %22 = vector.broadcast %c10_i32 : i32 to vector<8x128xi32>
    %23 = arith.cmpi slt, %21, %22 : vector<8x128xi32>
    %cst_13 = arith.constant -1.000000e+30 : f32
    %24 = vector.broadcast %cst_13 : f32 to vector<8x128xf32>
    %25 = arith.select %23, %20, %24 : vector<8x128xi1>, vector<8x128xf32>
    %cst_14 = arith.constant dense<0xFF800000> : vector<8xf32>
    %26 = vector.multi_reduction <maximumf>, %25, %cst_14 [1] : vector<8x128xf32> to vector<8xf32>
    %27 = vector.shape_cast %26 : vector<8xf32> to vector<8x1xf32>
    %28 = vector.broadcast %27 : vector<8x1xf32> to vector<8x128xf32>
    %29 = arith.subf %25, %28 : vector<8x128xf32>
    %30 = math.exp %29 : vector<8x128xf32>
    %cst_15 = arith.constant dense<0.000000e+00> : vector<8xf32>
    %31 = vector.multi_reduction <add>, %30, %cst_15 [1] : vector<8x128xf32> to vector<8xf32>
    %32 = vector.shape_cast %31 : vector<8xf32> to vector<8x1xf32>
    %33 = tpu.reciprocal %32 {approx = true} : vector<8x1xf32> -> vector<8x1xf32>
    %34 = vector.broadcast %33 : vector<8x1xf32> to vector<8x128xf32>
    %35 = arith.mulf %30, %34 : vector<8x128xf32>
    %c0_16 = arith.constant 0 : index
    %c0_17 = arith.constant 0 : index
    %36 = vector.load %arg3[%c0_16, %c0_17] : memref<8x128xf32, #tpu.memory_space<vmem>>, vector<8x128xf32>
    tpu.vector_store %arg3[%c0_16, %c0_17], %35 {strides = array<i32>} : memref<8x128xf32, #tpu.memory_space<vmem>>, vector<8x128xf32>,
    return
  }
}

</mosaic_0001>

<llo_original>
// kernel: tpu_custom_call.1
$region0: #{tpu_custom_call.1}
  #allocation0 [shape = 'u32[]', space=smem, size = 0x4, offset = 0x4, fixed_abs, tag = 'smem constant byte address 0x4 - core index']
  #allocation1 [shape = 'u32[72,128]{1,0:T(1,128)}', space=vmem, size = 0x9000, scoped, tag = 'internal scratch']
  %s0 = inlined_call_operand.hbm [shape: f32[8,100], index: 0, kind: input, shape index: {}]
  %s1 = inlined_call_operand.hbm [shape: f32[100,512], index: 1, kind: input, shape index: {}]
  %s2 = inlined_call_operand.hbm [shape: f32[512,128], index: 2, kind: input, shape index: {}]
  %s3 = inlined_call_operand.hbm [shape: f32[8,128], index: 3, kind: output, shape index: {}]
  %s4 = sld [smem:[#allocation0]]
  $region34: #{tpu_custom_call.1} parent=0
    _
  %s6 = ssub.s32 1, %s4
  %s7 = scalar_select 0, %s6, %s4
  $region1: #{tpu_custom_call.1} parent=0
    #allocation2 [shape = 'u8[4096]{0}', space=vmem, size = 0x1000, scoped, tag = 'input window, operand 0, single buffered']
    #allocation3 [shape = 's32[1]{0}', space=sflag, size = 0x4, scoped, tag = 'scoped memory for tpu_custom_call.1']
    #allocation4 [shape = 's32[1]{0}', space=sflag, size = 0x4, scoped, tag = 'scoped memory for tpu_custom_call.1']
    #allocation5 [shape = 'u8[212992]{0}', space=vmem, size = 0x34000, scoped, tag = 'input window, operand 1, single buffered']
    #allocation6 [shape = 's32[1]{0}', space=sflag, size = 0x4, scoped, tag = 'scoped memory for tpu_custom_call.1']
    #allocation7 [shape = 'u8[262144]{0}', space=vmem, size = 0x40000, scoped, tag = 'input window, operand 2, single buffered']
    #allocation8 [shape = 'u8[4096]{0}', space=vmem, size = 0x1000, scoped, tag = 'output window, operand 0, single buffered']
    %8 = vsyncpa [#allocation3], 0
    %9 = vsyncpa [#allocation6], 0
    %10 = vsyncpa [#allocation4], 0
    // Predicated region
    $region2: #{tpu_custom_call.1} parent=1 // pred_check
      _
    $region3: #{tpu_custom_call.1} parent=1 // pred_check_branch
      %12 = sbr.rel (0) target = $region5
    $region4: #{tpu_custom_call.1} parent=1 // pred_region
      %14 = vsyncadd [#allocation3], 0
      %s16 = sshll.u32 %s0, 4
      %s17 = int_to_ptr.hbm [resolvable:$true] %s16
      %s18 = sshll.u32 [#allocation2], 4
      %s19 = int_to_ptr.vmem [resolvable:$true] %s18
      %21 = dma.hbm_to_vmem [thread:$0]  %s17, 128, %s19, [#allocation3]
    $region5: #{tpu_custom_call.1} parent=1 // pred_fallthru
      _
    // Predicated region
    $region6: #{tpu_custom_call.1} parent=1 // pred_check
      _
    $region7: #{tpu_custom_call.1} parent=1 // pred_check_branch
      %23 = sbr.rel (0) target = $region9
    $region8: #{tpu_custom_call.1} parent=1 // pred_region
      %25 = vsyncadd [#allocation6], 0
      %s26 = sshll.u32 %s1, 4
      %s27 = int_to_ptr.hbm [resolvable:$true] %s26
      %s28 = sshll.u32 [#allocation5], 4
      %s29 = int_to_ptr.vmem [resolvable:$true] %s28
      %34 = dma.hbm_to_vmem [thread:$0]  %s27, 6656, %s29, [#allocation6], 512, 512, 32
    $region9: #{tpu_custom_call.1} parent=1 // pred_fallthru
      _
    // Predicated region
    $region10: #{tpu_custom_call.1} parent=1 // pred_check
      _
    $region11: #{tpu_custom_call.1} parent=1 // pred_check_branch
      %36 = sbr.rel (0) target = $region13
    $region12: #{tpu_custom_call.1} parent=1 // pred_region
      %38 = vsyncadd [#allocation6], 0
      %s39 = sshll.u32 %s2, 4
      %s40 = int_to_ptr.hbm [resolvable:$true] %s39
      %s41 = sshll.u32 [#allocation7], 4
      %s42 = int_to_ptr.vmem [resolvable:$true] %s41
      %47 = dma.hbm_to_vmem [thread:$0]  %s40, 8192, %s42, [#allocation6], 128, 128, 8
    $region13: #{tpu_custom_call.1} parent=1 // pred_fallthru
      _
    // Predicated region
    $region14: #{tpu_custom_call.1} parent=1 // pred_check
      _
    $region15: #{tpu_custom_call.1} parent=1 // pred_check_branch
      %49 = sbr.rel (0) target = $region17
    $region16: #{tpu_custom_call.1} parent=1 // pred_region
      %51 = dma.done [#allocation3], 128
    $region17: #{tpu_custom_call.1} parent=1 // pred_fallthru
      _
    // Predicated region
    $region18: #{tpu_custom_call.1} parent=1 // pred_check
      _
    $region19: #{tpu_custom_call.1} parent=1 // pred_check_branch
      %53 = sbr.rel (0) target = $region21
    $region20: #{tpu_custom_call.1} parent=1 // pred_region
      %55 = dma.done [#allocation6], 6656
    $region21: #{tpu_custom_call.1} parent=1 // pred_fallthru
      _
    // Predicated region
    $region22: #{tpu_custom_call.1} parent=1 // pred_check
      _
    $region23: #{tpu_custom_call.1} parent=1 // pred_check_branch
      %57 = sbr.rel (0) target = $region25
    $region24: #{tpu_custom_call.1} parent=1 // pred_region
      %59 = dma.done [#allocation6], 8192
    $region25: #{tpu_custom_call.1} parent=1 // pred_fallthru
      _
    %v60 = vld [vmem:[#allocation2] sm:$0xff]
    %v61 = vrcp.pop 10.0
    %v62 = vmul.f32 10.0, %v61
    %v63 = vsub.f32 1.0, %v62
    %v64 = vmul.f32 %v61, %v63
    %v65 = vadd.f32 %v61, %v64
    %vm66 = vweird.f32 %v61
    %v67 = vsel %vm66, %v61, %v65
    %v68 = vmul.f32 %v60, %v67
    %v69 = vfloor.f32 %v68
    %v70 = vsub.f32 %v69, 1.0
    %v71 = vld [vmem:[#allocation5] sm:$0xff]
    %v72 = vld [vmem:[#allocation5 + $0x8] sm:$0xff]
    %v73 = vld [vmem:[#allocation5 + $0x10] sm:$0xff]
    %v74 = vld [vmem:[#allocation5 + $0x18] sm:$0xff]
    %v75 = vld [vmem:[#allocation5 + $0x20] sm:$0xff]
    %v76 = vld [vmem:[#allocation5 + $0x28] sm:$0xff]
    %v77 = vld [vmem:[#allocation5 + $0x30] sm:$0xff]
    %v78 = vld [vmem:[#allocation5 + $0x38] sm:$0xff]
    %v79 = vld [vmem:[#allocation5 + $0x40] sm:$0xff]
    %v80 = vld [vmem:[#allocation5 + $0x48] sm:$0xff]
    %v81 = vld [vmem:[#allocation5 + $0x50] sm:$0xff]
    %v82 = vld [vmem:[#allocation5 + $0x58] sm:$0xff]
    %v83 = vld [vmem:[#allocation5 + $0x60] sm:$0xff]
    %v84 = vld [vmem:[#allocation5 + $0x68] sm:$0xff]
    %v85 = vld [vmem:[#allocation5 + $0x70] sm:$0xff]
    %v86 = vld [vmem:[#allocation5 + $0x78] sm:$0xff]
    %v87 = vld [vmem:[#allocation5 + $0x80] sm:$0xff]
    %v88 = vld [vmem:[#allocation5 + $0x88] sm:$0xff]
    %v89 = vld [vmem:[#allocation5 + $0x90] sm:$0xff]
    %v90 = vld [vmem:[#allocation5 + $0x98] sm:$0xff]
    %v91 = vld [vmem:[#allocation5 + $0xa0] sm:$0xff]
    %v92 = vld [vmem:[#allocation5 + $0xa8] sm:$0xff]
    %v93 = vld [vmem:[#allocation5 + $0xb0] sm:$0xff]
    %v94 = vld [vmem:[#allocation5 + $0xb8] sm:$0xff]
    %v95 = vld [vmem:[#allocation5 + $0xc0] sm:$0xff]
    %v96 = vld [vmem:[#allocation5 + $0xc8] sm:$0xff]
    %v97 = vld [vmem:[#allocation5 + $0xd0] sm:$0xff]
    %v98 = vld [vmem:[#allocation5 + $0xd8] sm:$0xff]
    %v99 = vld [vmem:[#allocation5 + $0xe0] sm:$0xff]
    %v100 = vld [vmem:[#allocation5 + $0xe8] sm:$0xff]
    %v101 = vld [vmem:[#allocation5 + $0xf0] sm:$0xff]
    %v102 = vld [vmem:[#allocation5 + $0xf8] sm:$0xff]
    %v103 = vld [vmem:[#allocation5 + $0x100] sm:$0xff]
    %v104 = vld [vmem:[#allocation5 + $0x108] sm:$0xff]
    %v105 = vld [vmem:[#allocation5 + $0x110] sm:$0xff]
    %v106 = vld [vmem:[#allocation5 + $0x118] sm:$0xff]
    %v107 = vld [vmem:[#allocation5 + $0x120] sm:$0xff]
    %v108 = vld [vmem:[#allocation5 + $0x128] sm:$0xff]
    %v109 = vld [vmem:[#allocation5 + $0x130] sm:$0xff]
    %v110 = vld [vmem:[#allocation5 + $0x138] sm:$0xff]
    %v111 = vld [vmem:[#allocation5 + $0x140] sm:$0xff]
    %v112 = vld [vmem:[#allocation5 + $0x148] sm:$0xff]
    %v113 = vld [vmem:[#allocation5 + $0x150] sm:$0xff]
    %v114 = vld [vmem:[#allocation5 + $0x158] sm:$0xff]
    %v115 = vld [vmem:[#allocation5 + $0x160] sm:$0xff]
    %v116 = vld [vmem:[#allocation5 + $0x168] sm:$0xff]
    %v117 = vld [vmem:[#allocation5 + $0x170] sm:$0xff]
    %v118 = vld [vmem:[#allocation5 + $0x178] sm:$0xff]
    %v119 = vld [vmem:[#allocation5 + $0x180] sm:$0xf]
    %v120 = vld [vmem:[#allocation5 + $0x188] sm:$0xf]
    %v121 = vld [vmem:[#allocation5 + $0x190] sm:$0xf]
    %v122 = vld [vmem:[#allocation5 + $0x198] sm:$0xf]
    %vm123 = vcmask 818176
    %v125 = vsel %vm123, %v70, 0
    %vm127 = vcmask 1043456
    %v129 = vsel %vm127, %v119, 0
    %v132 = vsel %vm127, %v120, 0
    %v135 = vsel %vm127, %v121, 0
    %v138 = vsel %vm127, %v122, 0
    %140 = vmatpush.msra.mxu0 0.0
    %141 = vmatpush.msra.mxu0 0.0
    %142 = vmatpush.msra.mxu0 0.0
    %143 = vmatpush.msra.mxu0 %v129
    %144 = vmatpush.msra.mxu0 %v115
    %145 = vmatpush.msra.mxu0 %v111
    %146 = vmatpush.msra.mxu0 %v107
    %147 = vmatpush.msra.mxu0 %v103
    %148 = vmatpush.msra.mxu0 %v99
    %149 = vmatpush.msra.mxu0 %v95
    %150 = vmatpush.msra.mxu0 %v91
    %151 = vmatpush.msra.mxu0 %v87
    %152 = vmatpush.msra.mxu0 %v83
    %153 = vmatpush.msra.mxu0 %v79
    %154 = vmatpush.msra.mxu0 %v75
    %155 = vmatpush.msra.mxu0 %v71
    %156 = vmatmul.f32.gmra.mxu0 %v125
    %v157 = vpop.f32.mrf.mxu0
    %v158 = vadd.f32 3.0, %v157
    %159 = vdwg.mxu0
    %160 = vmatpush.msra.mxu0 0.0
    %161 = vmatpush.msra.mxu0 0.0
    %162 = vmatpush.msra.mxu0 0.0
    %163 = vmatpush.msra.mxu0 %v132
    %164 = vmatpush.msra.mxu0 %v116
    %165 = vmatpush.msra.mxu0 %v112
    %166 = vmatpush.msra.mxu0 %v108
    %167 = vmatpush.msra.mxu0 %v104
    %168 = vmatpush.msra.mxu0 %v100
    %169 = vmatpush.msra.mxu0 %v96
    %170 = vmatpush.msra.mxu0 %v92
    %171 = vmatpush.msra.mxu0 %v88
    %172 = vmatpush.msra.mxu0 %v84
    %173 = vmatpush.msra.mxu0 %v80
    %174 = vmatpush.msra.mxu0 %v76
    %175 = vmatpush.msra.mxu0 %v72
    %176 = vmatmul.f32.gmra.mxu0 %v125
    %v177 = vpop.f32.mrf.mxu0
    %v178 = vadd.f32 3.0, %v177
    %179 = vdwg.mxu0
    %180 = vmatpush.msra.mxu0 0.0
    %181 = vmatpush.msra.mxu0 0.0
    %182 = vmatpush.msra.mxu0 0.0
    %183 = vmatpush.msra.mxu0 %v135
    %184 = vmatpush.msra.mxu0 %v117
    %185 = vmatpush.msra.mxu0 %v113
    %186 = vmatpush.msra.mxu0 %v109
    %187 = vmatpush.msra.mxu0 %v105
    %188 = vmatpush.msra.mxu0 %v101
    %189 = vmatpush.msra.mxu0 %v97
    %190 = vmatpush.msra.mxu0 %v93
    %191 = vmatpush.msra.mxu0 %v89
    %192 = vmatpush.msra.mxu0 %v85
    %193 = vmatpush.msra.mxu0 %v81
    %194 = vmatpush.msra.mxu0 %v77
    %195 = vmatpush.msra.mxu0 %v73
    %196 = vmatmul.f32.gmra.mxu0 %v125
    %v197 = vpop.f32.mrf.mxu0
    %v198 = vadd.f32 3.0, %v197
    %199 = vdwg.mxu0
    %200 = vmatpush.msra.mxu0 0.0
    %201 = vmatpush.msra.mxu0 0.0
    %202 = vmatpush.msra.mxu0 0.0
    %203 = vmatpush.msra.mxu0 %v138
    %204 = vmatpush.msra.mxu0 %v118
    %205 = vmatpush.msra.mxu0 %v114
    %206 = vmatpush.msra.mxu0 %v110
    %207 = vmatpush.msra.mxu0 %v106
    %208 = vmatpush.msra.mxu0 %v102
    %209 = vmatpush.msra.mxu0 %v98
    %210 = vmatpush.msra.mxu0 %v94
    %211 = vmatpush.msra.mxu0 %v90
    %212 = vmatpush.msra.mxu0 %v86
    %213 = vmatpush.msra.mxu0 %v82
    %214 = vmatpush.msra.mxu0 %v78
    %215 = vmatpush.msra.mxu0 %v74
    %216 = vmatmul.f32.gmra.mxu0 %v125
    %v217 = vpop.f32.mrf.mxu0
    %v218 = vadd.f32 3.0, %v217
    %219 = vdwg.mxu0
    %v220 = vmax.f32 %v158, 0.0
    %v221 = vmax.f32 %v178, 0.0
    %v222 = vmax.f32 %v198, 0.0
    %v223 = vmax.f32 %v218, 0.0
    %v224 = vrcp.pop 400.0
    %v225 = vmul.f32 400.0, %v224
    %v226 = vsub.f32 1.0, %v225
    %v227 = vmul.f32 %v224, %v226
    %v228 = vadd.f32 %v224, %v227
    %vm229 = vweird.f32 %v224
    %v230 = vsel %vm229, %v224, %v228
    %v231 = vmul.f32 %v220, %v230
    %v232 = vmul.f32 %v221, %v230
    %v233 = vmul.f32 %v222, %v230
    %v234 = vmul.f32 %v223, %v230
    %v235 = vfloor.f32 %v231
    %v236 = vfloor.f32 %v232
    %v237 = vfloor.f32 %v233
    %v238 = vfloor.f32 %v234
    %v239 = vadd.f32 %v235, 4.0
    %v240 = vadd.f32 %v236, 4.0
    %v241 = vadd.f32 %v237, 4.0
    %v242 = vadd.f32 %v238, 4.0
    %v243 = vld [vmem:[#allocation7] sm:$0xff]
    %v244 = vld [vmem:[#allocation7 + $0x8] sm:$0xff]
    %v245 = vld [vmem:[#allocation7 + $0x10] sm:$0xff]
    %v246 = vld [vmem:[#allocation7 + $0x18] sm:$0xff]
    %v247 = vld [vmem:[#allocation7 + $0x20] sm:$0xff]
    %v248 = vld [vmem:[#allocation7 + $0x28] sm:$0xff]
    %v249 = vld [vmem:[#allocation7 + $0x30] sm:$0xff]
    %v250 = vld [vmem:[#allocation7 + $0x38] sm:$0xff]
    %v251 = vld [vmem:[#allocation7 + $0x40] sm:$0xff]
    %v252 = vld [vmem:[#allocation7 + $0x48] sm:$0xff]
    %v253 = vld [vmem:[#allocation7 + $0x50] sm:$0xff]
    %v254 = vld [vmem:[#allocation7 + $0x58] sm:$0xff]
    %v255 = vld [vmem:[#allocation7 + $0x60] sm:$0xff]
    %v256 = vld [vmem:[#allocation7 + $0x68] sm:$0xff]
    %v257 = vld [vmem:[#allocation7 + $0x70] sm:$0xff]
    %v258 = vld [vmem:[#allocation7 + $0x78] sm:$0xff]
    %v259 = vld [vmem:[#allocation7 + $0x80] sm:$0xff]
    %v260 = vld [vmem:[#allocation7 + $0x88] sm:$0xff]
    %v261 = vld [vmem:[#allocation7 + $0x90] sm:$0xff]
    %v262 = vld [vmem:[#allocation7 + $0x98] sm:$0xff]
    %v263 = vld [vmem:[#allocation7 + $0xa0] sm:$0xff]
    %v264 = vld [vmem:[#allocation7 + $0xa8] sm:$0xff]
    %v265 = vld [vmem:[#allocation7 + $0xb0] sm:$0xff]
    %v266 = vld [vmem:[#allocation7 + $0xb8] sm:$0xff]
    %v267 = vld [vmem:[#allocation7 + $0xc0] sm:$0xff]
    %v268 = vld [vmem:[#allocation7 + $0xc8] sm:$0xff]
    %v269 = vld [vmem:[#allocation7 + $0xd0] sm:$0xff]
    %v270 = vld [vmem:[#allocation7 + $0xd8] sm:$0xff]
    %v271 = vld [vmem:[#allocation7 + $0xe0] sm:$0xff]
    %v272 = vld [vmem:[#allocation7 + $0xe8] sm:$0xff]
    %v273 = vld [vmem:[#allocation7 + $0xf0] sm:$0xff]
    %v274 = vld [vmem:[#allocation7 + $0xf8] sm:$0xff]
    %v275 = vld [vmem:[#allocation7 + $0x100] sm:$0xff]
    %v276 = vld [vmem:[#allocation7 + $0x108] sm:$0xff]
    %v277 = vld [vmem:[#allocation7 + $0x110] sm:$0xff]
    %v278 = vld [vmem:[#allocation7 + $0x118] sm:$0xff]
    %v279 = vld [vmem:[#allocation7 + $0x120] sm:$0xff]
    %v280 = vld [vmem:[#allocation7 + $0x128] sm:$0xff]
    %v281 = vld [vmem:[#allocation7 + $0x130] sm:$0xff]
    %v282 = vld [vmem:[#allocation7 + $0x138] sm:$0xff]
    %v283 = vld [vmem:[#allocation7 + $0x140] sm:$0xff]
    %v284 = vld [vmem:[#allocation7 + $0x148] sm:$0xff]
    %v285 = vld [vmem:[#allocation7 + $0x150] sm:$0xff]
    %v286 = vld [vmem:[#allocation7 + $0x158] sm:$0xff]
    %v287 = vld [vmem:[#allocation7 + $0x160] sm:$0xff]
    %v288 = vld [vmem:[#allocation7 + $0x168] sm:$0xff]
    %v289 = vld [vmem:[#allocation7 + $0x170] sm:$0xff]
    %v290 = vld [vmem:[#allocation7 + $0x178] sm:$0xff]
    %v291 = vld [vmem:[#allocation7 + $0x180] sm:$0xff]
    %v292 = vld [vmem:[#allocation7 + $0x188] sm:$0xff]
    %v293 = vld [vmem:[#allocation7 + $0x190] sm:$0xff]
    %v294 = vld [vmem:[#allocation7 + $0x198] sm:$0xff]
    %v295 = vld [vmem:[#allocation7 + $0x1a0] sm:$0xff]
    %v296 = vld [vmem:[#allocation7 + $0x1a8] sm:$0xff]
    %v297 = vld [vmem:[#allocation7 + $0x1b0] sm:$0xff]
    %v298 = vld [vmem:[#allocation7 + $0x1b8] sm:$0xff]
    %v299 = vld [vmem:[#allocation7 + $0x1c0] sm:$0xff]
    %v300 = vld [vmem:[#allocation7 + $0x1c8] sm:$0xff]
    %v301 = vld [vmem:[#allocation7 + $0x1d0] sm:$0xff]
    %v302 = vld [vmem:[#allocation7 + $0x1d8] sm:$0xff]
    %v303 = vld [vmem:[#allocation7 + $0x1e0] sm:$0xff]
    %v304 = vld [vmem:[#allocation7 + $0x1e8] sm:$0xff]
    %v305 = vld [vmem:[#allocation7 + $0x1f0] sm:$0xff]
    %v306 = vld [vmem:[#allocation7 + $0x1f8] sm:$0xff]
    %307 = vmatpush.msra.mxu0 %v258
    %308 = vmatpush.msra.mxu0 %v257
    %309 = vmatpush.msra.mxu0 %v256
    %310 = vmatpush.msra.mxu0 %v255
    %311 = vmatpush.msra.mxu0 %v254
    %312 = vmatpush.msra.mxu0 %v253
    %313 = vmatpush.msra.mxu0 %v252
    %314 = vmatpush.msra.mxu0 %v251
    %315 = vmatpush.msra.mxu0 %v250
    %316 = vmatpush.msra.mxu0 %v249
    %317 = vmatpush.msra.mxu0 %v248
    %318 = vmatpush.msra.mxu0 %v247
    %319 = vmatpush.msra.mxu0 %v246
    %320 = vmatpush.msra.mxu0 %v245
    %321 = vmatpush.msra.mxu0 %v244
    %322 = vmatpush.msra.mxu0 %v243
    %323 = vmatmul.f32.gmra.mxu0 %v239
    %v324 = vpop.f32.mrf.mxu0
    %v325 = vadd.f32 3.0, %v324
    %326 = vdwg.mxu0
    %327 = vmatpush.msra.mxu0 %v274
    %328 = vmatpush.msra.mxu0 %v273
    %329 = vmatpush.msra.mxu0 %v272
    %330 = vmatpush.msra.mxu0 %v271
    %331 = vmatpush.msra.mxu0 %v270
    %332 = vmatpush.msra.mxu0 %v269
    %333 = vmatpush.msra.mxu0 %v268
    %334 = vmatpush.msra.mxu0 %v267
    %335 = vmatpush.msra.mxu0 %v266
    %336 = vmatpush.msra.mxu0 %v265
    %337 = vmatpush.msra.mxu0 %v264
    %338 = vmatpush.msra.mxu0 %v263
    %339 = vmatpush.msra.mxu0 %v262
    %340 = vmatpush.msra.mxu0 %v261
    %341 = vmatpush.msra.mxu0 %v260
    %342 = vmatpush.msra.mxu0 %v259
    %343 = vmatmul.f32.gmra.mxu0 %v240
    %v344 = vpop.f32.mrf.mxu0
    %v345 = vadd.f32 %v325, %v344
    %346 = vdwg.mxu0
    %347 = vmatpush.msra.mxu0 %v290
    %348 = vmatpush.msra.mxu0 %v289
    %349 = vmatpush.msra.mxu0 %v288
    %350 = vmatpush.msra.mxu0 %v287
    %351 = vmatpush.msra.mxu0 %v286
    %352 = vmatpush.msra.mxu0 %v285
    %353 = vmatpush.msra.mxu0 %v284
    %354 = vmatpush.msra.mxu0 %v283
    %355 = vmatpush.msra.mxu0 %v282
    %356 = vmatpush.msra.mxu0 %v281
    %357 = vmatpush.msra.mxu0 %v280
    %358 = vmatpush.msra.mxu0 %v279
    %359 = vmatpush.msra.mxu0 %v278
    %360 = vmatpush.msra.mxu0 %v277
    %361 = vmatpush.msra.mxu0 %v276
    %362 = vmatpush.msra.mxu0 %v275
    %363 = vmatmul.f32.gmra.mxu0 %v241
    %v364 = vpop.f32.mrf.mxu0
    %v365 = vadd.f32 %v345, %v364
    %366 = vdwg.mxu0
    %367 = vmatpush.msra.mxu0 %v306
    %368 = vmatpush.msra.mxu0 %v305
    %369 = vmatpush.msra.mxu0 %v304
    %370 = vmatpush.msra.mxu0 %v303
    %371 = vmatpush.msra.mxu0 %v302
    %372 = vmatpush.msra.mxu0 %v301
    %373 = vmatpush.msra.mxu0 %v300
    %374 = vmatpush.msra.mxu0 %v299
    %375 = vmatpush.msra.mxu0 %v298
    %376 = vmatpush.msra.mxu0 %v297
    %377 = vmatpush.msra.mxu0 %v296
    %378 = vmatpush.msra.mxu0 %v295
    %379 = vmatpush.msra.mxu0 %v294
    %380 = vmatpush.msra.mxu0 %v293
    %381 = vmatpush.msra.mxu0 %v292
    %382 = vmatpush.msra.mxu0 %v291
    %383 = vmatmul.f32.gmra.mxu0 %v242
    %v384 = vpop.f32.mrf.mxu0
    %v385 = vadd.f32 %v365, %v384
    %386 = vdwg.mxu0
    %v387 = vlaneseq
    %v388 = vand.u32 %v387, 127
    %vm389 = vcmp.lt.s32.totalorder %v388, 10
    %v390 = vsel %vm389, %v385, -1e+30
    %391 = vmax.xlane.f32.xlu0 %v390
    %v392 = vpop.xlane.xlu0 %391
    %v393 = vsub.f32 %v390, %v392
    %v394 = vmul.f32 %v393, 1.442695
    %v395 = vpow.pop %v394
    %396 = vadd.xlane.f32.xlu0 %v395
    %v397 = vpop.xlane.xlu0 %396
    %v398 = vrcp.pop %v397
    %v399 = vmul.f32 %v395, %v398
    %400 = vst [vmem:[#allocation8] sm:$0xff] %v399
    // Predicated region
    $region26: #{tpu_custom_call.1} parent=1 // pred_check
      _
    $region27: #{tpu_custom_call.1} parent=1 // pred_check_branch
      %402 = sbr.rel (0) target = $region29
    $region28: #{tpu_custom_call.1} parent=1 // pred_region
      %404 = vsyncadd [#allocation4], 0
      %s406 = sshll.u32 [#allocation8], 4
      %s407 = int_to_ptr.vmem [resolvable:$true] %s406
      %s408 = sshll.u32 %s3, 4
      %s409 = int_to_ptr.hbm [resolvable:$true] %s408
      %411 = dma.vmem_to_hbm [thread:$0]  %s407, 128, %s409, [#allocation4]
    $region29: #{tpu_custom_call.1} parent=1 // pred_fallthru
      _
    // Predicated region
    $region30: #{tpu_custom_call.1} parent=1 // pred_check
      _
    $region31: #{tpu_custom_call.1} parent=1 // pred_check_branch
      %413 = sbr.rel (0) target = $region33
    $region32: #{tpu_custom_call.1} parent=1 // pred_region
      %415 = dma.done [#allocation4], 128
    $region33: #{tpu_custom_call.1} parent=1 // pred_fallthru
      _
    %416 = vsyncpa [#allocation3], 1
    %417 = vsyncpa [#allocation6], 1
    %418 = vsyncpa [#allocation4], 1

</llo_original>
